<compile_context>
chip_gen: v7x
topology: tpu7x:2x2x1
jax: 0.10.0
libtpu: 0.0.40
codegen_flags: <defaults>
</compile_context>

<pallas_src>
import functools

import jax
import jax.numpy as jnp
from jax.experimental import pallas as pl
from jax.experimental.pallas import tpu as pltpu

HIDDEN = 32          # hidden width of fc1/fc2
MAX_BLOCK_B = 512    # batch tile cap (VMEM-safe on v5e/v6e/v7x)


# ---------------------------------------------------------------------------
# Parameter packing: one slab = [w1 ; w2 ; w3 ; b1 ; b2 ; b3] (zero padded)
# ---------------------------------------------------------------------------
def pack_params(params, compute_dtype=jnp.float32):
    w1, b1, w2, b2, w3, b3 = (params["w1"], params["b1"], params["w2"],
                              params["b2"], params["w3"], params["b3"])
    S = w1.shape[0]
    A = w3.shape[1]
    H = HIDDEN
    W = max(H, A)                       # lane width of the slab
    R = S + 2 * H + 3                   # rows: w1 | w2 | w3 | b1,b2,b3
    R_pad = -(-R // 8) * 8              # round up to sublane multiple

    slab = jnp.zeros((R_pad, W), jnp.float32)
    slab = slab.at[0:S, 0:H].set(w1)
    slab = slab.at[S:S + H, 0:H].set(w2)
    slab = slab.at[S + H:S + 2 * H, 0:A].set(w3)
    slab = slab.at[S + 2 * H, 0:H].set(b1.reshape(H))
    slab = slab.at[S + 2 * H + 1, 0:H].set(b2.reshape(H))
    slab = slab.at[S + 2 * H + 2, 0:A].set(b3.reshape(A))
    return slab.astype(compute_dtype)


# ---------------------------------------------------------------------------
# Kernels
# ---------------------------------------------------------------------------
def _forward_block(x, slab_ref, S, H, A):
    """Fused 3-layer MLP on one (TB, S) row block; returns f32 (TB, A)."""
    w1 = slab_ref[0:S, 0:H]
    w2 = slab_ref[S:S + H, 0:H]
    w3 = slab_ref[S + H:S + 2 * H, 0:A]
    b1 = slab_ref[S + 2 * H:S + 2 * H + 1, 0:H]          # (1, H)
    b2 = slab_ref[S + 2 * H + 1:S + 2 * H + 2, 0:H]      # (1, H)
    b3 = slab_ref[S + 2 * H + 2:S + 2 * H + 3, 0:A]      # (1, A)

    h = jnp.dot(x, w1, preferred_element_type=jnp.float32) + b1
    h = jnp.maximum(h, 0.0)
    h = jnp.dot(h.astype(w2.dtype), w2, preferred_element_type=jnp.float32) + b2
    h = jnp.maximum(h, 0.0)
    out = jnp.dot(h.astype(w3.dtype), w3, preferred_element_type=jnp.float32) + b3
    return out                                            # f32 (TB, A)


def mlp_kernel(x_ref, slab_ref, o_ref, *, S, H, A):
    o_ref[...] = _forward_block(x_ref[...], slab_ref, S, H, A).astype(o_ref.dtype)


def mlp_argmax_kernel(x_ref, slab_ref, a_ref, *, S, H, A):
    """Forward + fused argmax over actions; writes (TB, 1) int32."""
    logits = _forward_block(x_ref[...], slab_ref, S, H, A)      # (TB, A) f32
    mx = jnp.max(logits, axis=1, keepdims=True)
    idx = jax.lax.broadcasted_iota(jnp.int32, logits.shape, 1)
    # first-max tie-breaking (matches torch.max behaviour)
    a_ref[...] = jnp.min(jnp.where(logits == mx, idx, A), axis=1, keepdims=True)


# ---------------------------------------------------------------------------
# Wrappers
# ---------------------------------------------------------------------------
def _run(kernel_fn, x, packed, out_feat, out_dtype, action_size,
         block_b=MAX_BLOCK_B):
    B, S = x.shape
    TB = B if B <= block_b else block_b       # TB == B (full dim) or multiple of 8
    kern = functools.partial(kernel_fn, S=S, H=HIDDEN, A=action_size)
    return pl.pallas_call(
        kern,
        out_shape=jax.ShapeDtypeStruct((B, out_feat), out_dtype),
        grid=(pl.cdiv(B, TB),),
        in_specs=[
            pl.BlockSpec((TB, S), lambda i: (i, 0)),          # x: tiled over batch
            pl.BlockSpec(packed.shape, lambda i: (0, 0)),     # params: resident slab
        ],
        out_specs=pl.BlockSpec((TB, out_feat), lambda i: (i, 0)),
        compiler_params=pltpu.CompilerParams(
            dimension_semantics=("parallel",)),
    )(x.astype(packed.dtype), packed)


def mymodel_forward(x, packed, *, action_size):
    """x: (B, state_size). packed: slab from pack_params. Returns (B, A) f32."""
    return _run(mlp_kernel, x, packed, action_size, jnp.float32, action_size)


def select_action(state, packed, *, action_size):
    """PyTorch: forward(state).max(1)[1].view(1,1) -> fused argmax in-kernel."""
    act = _run(mlp_argmax_kernel, state, packed, 1, jnp.int32, action_size)
    return act.reshape(state.shape[0], 1)     # (1, 1) int32 for a single state


# ---------------------------------------------------------------------------
# Init (mirrors nn.Linear shapes, stored transposed as (in, out))
# ---------------------------------------------------------------------------
def init_params(key, state_size, action_size):
    ks = jax.random.split(key, 6)

    def lin(kw, kb, fan_in, fan_out):
        bound = 1.0 / jnp.sqrt(fan_in)
        w = jax.random.uniform(kw, (fan_in, fan_out), jnp.float32, -bound, bound)
        b = jax.random.uniform(kb, (1, fan_out), jnp.float32, -bound, bound)
        return w, b

    w1, b1 = lin(ks[0], ks[1], state_size, HIDDEN)
    w2, b2 = lin(ks[2], ks[3], HIDDEN, HIDDEN)
    w3, b3 = lin(ks[4], ks[5], HIDDEN, action_size)
    return dict(w1=w1, b1=b1, w2=w2, b2=b2, w3=w3, b3=b3)


if __name__ == "__main__":
    state_size, action_size, batch = 8, 4, 2

    key = jax.random.PRNGKey(0)
    k_params, k_x = jax.random.split(key)
    params = init_params(k_params, state_size, action_size)
    packed = pack_params(params)                         # f32 slab, single DMA
    x = jax.random.normal(k_x, (batch, state_size), jnp.float32)

    out = jax.block_until_ready(mymodel_forward(x, packed, action_size=action_size))
    assert out.shape == (batch, action_size)

    # Pure-JAX reference check of the fused kernel.
    h = jnp.maximum(x @ params["w1"] + params["b1"], 0.0)
    h = jnp.maximum(h @ params["w2"] + params["b2"], 0.0)
    ref = h @ params["w3"] + params["b3"]
    assert jnp.allclose(out, ref, atol=1e-5, rtol=1e-5)

    # select_action path (single state, batch=1) with fused in-kernel argmax.
    act = jax.block_until_ready(select_action(x[:1], packed, action_size=action_size))
    assert act.shape == (1, 1)
    assert int(act[0, 0]) == int(jnp.argmax(ref[:1], axis=1)[0])

    print("KERNEL_OK")
</pallas_src>

<mosaic_0001>
module attributes {stable_mosaic.version = 11 : i64} {
  func.func @mlp_kernel(%arg0: i32, %arg1: memref<2x8xf32, #tpu.memory_space<vmem>>, %arg2: memref<80x32xf32, #tpu.memory_space<vmem>>, %arg3: memref<2x4xf32, #tpu.memory_space<vmem>>) attributes {dimension_semantics = [#tpu.dimension_semantics<parallel>], iteration_bounds = array<i64: 1>, scalar_prefetch = 0 : i64, scratch_operands = 0 : i64, tpu.core_type = #tpu.core_type<tc>, window_params = [{transform_indices = @transform_0, window_bounds = array<i64: 2, 8>}, {pipeline_mode = #tpu.pipeline_mode<synchronous>, transform_indices = @transform_1, window_bounds = array<i64: 80, 32>}, {transform_indices = @transform_2, window_bounds = array<i64: 2, 4>}]} {
    %c0 = arith.constant 0 : index
    %c0_0 = arith.constant 0 : index
    %0 = vector.load %arg1[%c0, %c0_0] : memref<2x8xf32, #tpu.memory_space<vmem>>, vector<2x8xf32>
    %c0_1 = arith.constant 0 : index
    %c0_2 = arith.constant 0 : index
    %1 = vector.load %arg2[%c0_1, %c0_2] : memref<80x32xf32, #tpu.memory_space<vmem>>, vector<8x32xf32>
    %c8 = arith.constant 8 : index
    %c0_3 = arith.constant 0 : index
    %2 = vector.load %arg2[%c8, %c0_3] : memref<80x32xf32, #tpu.memory_space<vmem>>, vector<32x32xf32>
    %c40 = arith.constant 40 : index
    %c0_4 = arith.constant 0 : index
    %3 = vector.load %arg2[%c40, %c0_4] : memref<80x32xf32, #tpu.memory_space<vmem>>, vector<32x4xf32>
    %c72 = arith.constant 72 : index
    %c0_5 = arith.constant 0 : index
    %4 = vector.load %arg2[%c72, %c0_5] : memref<80x32xf32, #tpu.memory_space<vmem>>, vector<1x32xf32>
    %c73 = arith.constant 73 : index
    %c0_6 = arith.constant 0 : index
    %5 = vector.load %arg2[%c73, %c0_6] : memref<80x32xf32, #tpu.memory_space<vmem>>, vector<1x32xf32>
    %c74 = arith.constant 74 : index
    %c0_7 = arith.constant 0 : index
    %6 = vector.load %arg2[%c74, %c0_7] : memref<80x32xf32, #tpu.memory_space<vmem>>, vector<1x4xf32>
    %cst = arith.constant dense<0.000000e+00> : vector<2x32xf32>
    %7 = tpu.matmul %0, %1, %cst {dimension_numbers = #tpu.dot_dimension_numbers<[1], [0], [0], [1], [0, 0, 1, 1], [], []>} : vector<2x8xf32>, vector<8x32xf32>, vector<2x32xf32> -> vector<2x32xf32>
    %8 = vector.broadcast %4 : vector<1x32xf32> to vector<2x32xf32>
    %9 = arith.addf %7, %8 : vector<2x32xf32>
    %cst_8 = arith.constant 0.000000e+00 : f32
    %10 = vector.broadcast %cst_8 : f32 to vector<2x32xf32>
    %11 = arith.maximumf %9, %10 : vector<2x32xf32>
    %cst_9 = arith.constant dense<0.000000e+00> : vector<2x32xf32>
    %12 = tpu.matmul %11, %2, %cst_9 {dimension_numbers = #tpu.dot_dimension_numbers<[1], [0], [0], [1], [0, 0, 1, 1], [], []>} : vector<2x32xf32>, vector<32x32xf32>, vector<2x32xf32> -> vector<2x32xf32>
    %13 = vector.broadcast %5 : vector<1x32xf32> to vector<2x32xf32>
    %14 = arith.addf %12, %13 : vector<2x32xf32>
    %cst_10 = arith.constant 0.000000e+00 : f32
    %15 = vector.broadcast %cst_10 : f32 to vector<2x32xf32>
    %16 = arith.maximumf %14, %15 : vector<2x32xf32>
    %cst_11 = arith.constant dense<0.000000e+00> : vector<2x4xf32>
    %17 = tpu.matmul %16, %3, %cst_11 {dimension_numbers = #tpu.dot_dimension_numbers<[1], [0], [0], [1], [0, 0, 1, 1], [], []>} : vector<2x32xf32>, vector<32x4xf32>, vector<2x4xf32> -> vector<2x4xf32>
    %18 = vector.broadcast %6 : vector<1x4xf32> to vector<2x4xf32>
    %19 = arith.addf %17, %18 : vector<2x4xf32>
    %c0_12 = arith.constant 0 : index
    %c0_13 = arith.constant 0 : index
    %20 = vector.load %arg3[%c0_12, %c0_13] : memref<2x4xf32, #tpu.memory_space<vmem>>, vector<2x4xf32>
    tpu.vector_store %arg3[%c0_12, %c0_13], %19 {strides = array<i32>} : memref<2x4xf32, #tpu.memory_space<vmem>>, vector<2x4xf32>,
    return
  }
  func.func @transform_0(%arg0: i32) -> (i32, i32) {
    %c0_i32 = arith.constant 0 : i32
    %c0_i32_0 = arith.constant 0 : i32
    return %arg0, %c0_i32 : i32, i32
  }
  func.func @transform_1(%arg0: i32) -> (i32, i32) {
    %c0_i32 = arith.constant 0 : i32
    %c0_i32_0 = arith.constant 0 : i32
    %c0_i32_1 = arith.constant 0 : i32
    return %c0_i32, %c0_i32_0 : i32, i32
  }
  func.func @transform_2(%arg0: i32) -> (i32, i32) {
    %c0_i32 = arith.constant 0 : i32
    %c0_i32_0 = arith.constant 0 : i32
    return %arg0, %c0_i32 : i32, i32
  }
}

</mosaic_0001>

<llo_original>
// kernel: tpu_custom_call.1
$region0: #{tpu_custom_call.1}
  #allocation0 [shape = 'u32[]', space=smem, size = 0x4, offset = 0x4, fixed_abs, tag = 'smem constant byte address 0x4 - core index']
  #allocation1 [shape = 'u32[144,128]{1,0:T(1,128)}', space=vmem, size = 0x12000, scoped, tag = 'internal scratch']
  %s0 = inlined_call_operand.vmem [shape: f32[2,8], index: 0, kind: input, shape index: {}]
  %s1 = inlined_call_operand.vmem [shape: f32[80,32], index: 1, kind: input, shape index: {}]
  %s2 = inlined_call_operand.hbm [shape: f32[2,4], index: 2, kind: output, shape index: {}]
  %s3 = sld [smem:[#allocation0]]
  $region18: #{tpu_custom_call.1} parent=0
    _
  %s5 = ssub.s32 1, %s3
  %s6 = scalar_select 0, %s5, %s3
  $region1: #{tpu_custom_call.1} parent=0
    #allocation2 [shape = 'u8[1024]{0}', space=vmem, size = 0x400, scoped, tag = 'output window, operand 0, single buffered']
    #allocation3 [shape = 's32[1]{0}', space=sflag, size = 0x4, scoped, tag = 'scoped memory for tpu_custom_call.1']
    %7 = vsyncpa [#allocation3], 0
    // Predicated region
    $region2: #{tpu_custom_call.1} parent=1 // pred_check
      _
    $region3: #{tpu_custom_call.1} parent=1 // pred_check_branch
      %9 = sbr.rel (0) target = $region5
    $region4: #{tpu_custom_call.1} parent=1 // pred_region
      _
    $region5: #{tpu_custom_call.1} parent=1 // pred_fallthru
      _
    // Predicated region
    $region6: #{tpu_custom_call.1} parent=1 // pred_check
      _
    $region7: #{tpu_custom_call.1} parent=1 // pred_check_branch
      %11 = sbr.rel (0) target = $region9
    $region8: #{tpu_custom_call.1} parent=1 // pred_region
      _
    $region9: #{tpu_custom_call.1} parent=1 // pred_fallthru
      _
    %v12 = vld [vmem:[%s0] sm:$0x3]
    %v13 = vld [vmem:[%s1] sm:$0xff]
    %v14 = vld [vmem:[%s1 + $0x8] sm:$0xff]
    %v15 = vld [vmem:[%s1 + $0x10] sm:$0xff]
    %v16 = vld [vmem:[%s1 + $0x18] sm:$0xff]
    %v17 = vld [vmem:[%s1 + $0x20] sm:$0xff]
    %v18 = vld [vmem:[%s1 + $0x28] sm:$0xff]
    %v19 = vld [vmem:[%s1 + $0x30] sm:$0xff]
    %v20 = vld [vmem:[%s1 + $0x38] sm:$0xff]
    %v21 = vld [vmem:[%s1 + $0x40] sm:$0xff]
    %v22 = vld [vmem:[%s1 + $0x48] sm:$0x1]
    %v23 = vld [vmem:[%s1 + $0x49] sm:$0x1]
    %v24 = vld [vmem:[%s1 + $0x4a] sm:$0x1]
    %v25 = vlaneseq
    %v26 = vshrl.u32 %v25, 7
    %v27 = vsub.s32 0, %v26
    %v28 = vrot.slane %v22, %v27
    %vm29 = vcmask 64512
    %v31 = vsel %vm29, %v12, 0
    %33 = vmatprep.subr.mxu0 0.0
    %34 = vmatpush1.msra.mxu0 %v13
    %35 = vmatprep.subr.mxu0 0.0
    %36 = vmatpush1.msra.mxu0 0.0
    %37 = vmatprep.subr.mxu0 0.0
    %38 = vmatpush1.msra.mxu0 0.0
    %39 = vmatprep.subr.mxu0 0.0
    %40 = vmatpush1.msra.mxu0 0.0
    %41 = vmatprep.subr.mxu0 0.0
    %42 = vmatpush1.msra.mxu0 0.0
    %43 = vmatprep.subr.mxu0 0.0
    %44 = vmatpush1.msra.mxu0 0.0
    %45 = vmatprep.subr.mxu0 0.0
    %46 = vmatpush1.msra.mxu0 0.0
    %47 = vmatprep.subr.mxu0 0.0
    %48 = vmatpush1.msra.mxu0 0.0
    %49 = vmatprep.subr.mxu0 0.0
    %50 = vmatpush1.msra.mxu0 0.0
    %51 = vmatprep.subr.mxu0 0.0
    %52 = vmatpush1.msra.mxu0 0.0
    %53 = vmatprep.subr.mxu0 0.0
    %54 = vmatpush1.msra.mxu0 0.0
    %55 = vmatprep.subr.mxu0 0.0
    %56 = vmatpush1.msra.mxu0 0.0
    %57 = vmatprep.subr.mxu0 0.0
    %58 = vmatpush1.msra.mxu0 0.0
    %59 = vmatprep.subr.mxu0 0.0
    %60 = vmatpush1.msra.mxu0 0.0
    %61 = vmatprep.subr.mxu0 0.0
    %62 = vmatpush1.msra.mxu0 0.0
    %63 = vmatprep.subr.mxu0 0.0
    %64 = vmatpush1.msra.mxu0 0.0
    %65 = vmatprep.subr.mxu0 0.0
    %66 = vmatpush1.msra.mxu0 0.0
    %67 = vmatprep.subr.mxu0 0.0
    %68 = vmatpush1.msra.mxu0 0.0
    %69 = vmatprep.subr.mxu0 0.0
    %70 = vmatpush1.msra.mxu0 0.0
    %71 = vmatprep.subr.mxu0 0.0
    %72 = vmatpush1.msra.mxu0 0.0
    %73 = vmatprep.subr.mxu0 0.0
    %74 = vmatpush1.msra.mxu0 0.0
    %75 = vmatprep.subr.mxu0 0.0
    %76 = vmatpush1.msra.mxu0 0.0
    %77 = vmatprep.subr.mxu0 0.0
    %78 = vmatpush1.msra.mxu0 0.0
    %79 = vmatprep.subr.mxu0 0.0
    %80 = vmatpush1.msra.mxu0 0.0
    %81 = vmatprep.subr.mxu0 0.0
    %82 = vmatpush1.msra.mxu0 0.0
    %83 = vmatprep.subr.mxu0 0.0
    %84 = vmatpush1.msra.mxu0 0.0
    %85 = vmatprep.subr.mxu0 0.0
    %86 = vmatpush1.msra.mxu0 0.0
    %87 = vmatprep.subr.mxu0 0.0
    %88 = vmatpush1.msra.mxu0 0.0
    %89 = vmatprep.subr.mxu0 0.0
    %90 = vmatpush1.msra.mxu0 0.0
    %91 = vmatprep.subr.mxu0 0.0
    %92 = vmatpush1.msra.mxu0 0.0
    %93 = vmatprep.subr.mxu0 0.0
    %94 = vmatpush1.msra.mxu0 0.0
    %95 = vmatprep.subr.mxu0 0.0
    %96 = vmatpush1.msra.mxu0 0.0
    %97 = vmatprep.mubr.f32.mxu0 0.0
    %98 = vmatmul.mubr.f32.gmra.mrb[0].mxu0 %v31
    %v99 = vpop.f32.mrb[0].mxu0
    %v100 = vadd.f32 %v28, %v99
    %v101 = vpop.f32.mrb[0].mxu0
    %102 = vdwg.mxu0
    %v103 = vmax.f32 %v100, 0.0
    %v104 = vlaneseq
    %v105 = vshrl.u32 %v104, 7
    %v106 = vsub.s32 0, %v105
    %v107 = vrot.slane %v23, %v106
    %vm108 = vcmask 261120
    %v110 = vsel %vm108, %v103, 0
    %112 = vmatprep.subr.mxu0 0.0
    %113 = vmatpush1.msra.mxu0 %v14
    %114 = vmatprep.subr.mxu0 0.0
    %115 = vmatpush1.msra.mxu0 %v15
    %116 = vmatprep.subr.mxu0 0.0
    %117 = vmatpush1.msra.mxu0 %v16
    %118 = vmatprep.subr.mxu0 0.0
    %119 = vmatpush1.msra.mxu0 %v17
    %120 = vmatprep.subr.mxu0 0.0
    %121 = vmatpush1.msra.mxu0 0.0
    %122 = vmatprep.subr.mxu0 0.0
    %123 = vmatpush1.msra.mxu0 0.0
    %124 = vmatprep.subr.mxu0 0.0
    %125 = vmatpush1.msra.mxu0 0.0
    %126 = vmatprep.subr.mxu0 0.0
    %127 = vmatpush1.msra.mxu0 0.0
    %128 = vmatprep.subr.mxu0 0.0
    %129 = vmatpush1.msra.mxu0 0.0
    %130 = vmatprep.subr.mxu0 0.0
    %131 = vmatpush1.msra.mxu0 0.0
    %132 = vmatprep.subr.mxu0 0.0
    %133 = vmatpush1.msra.mxu0 0.0
    %134 = vmatprep.subr.mxu0 0.0
    %135 = vmatpush1.msra.mxu0 0.0
    %136 = vmatprep.subr.mxu0 0.0
    %137 = vmatpush1.msra.mxu0 0.0
    %138 = vmatprep.subr.mxu0 0.0
    %139 = vmatpush1.msra.mxu0 0.0
    %140 = vmatprep.subr.mxu0 0.0
    %141 = vmatpush1.msra.mxu0 0.0
    %142 = vmatprep.subr.mxu0 0.0
    %143 = vmatpush1.msra.mxu0 0.0
    %144 = vmatprep.subr.mxu0 0.0
    %145 = vmatpush1.msra.mxu0 0.0
    %146 = vmatprep.subr.mxu0 0.0
    %147 = vmatpush1.msra.mxu0 0.0
    %148 = vmatprep.subr.mxu0 0.0
    %149 = vmatpush1.msra.mxu0 0.0
    %150 = vmatprep.subr.mxu0 0.0
    %151 = vmatpush1.msra.mxu0 0.0
    %152 = vmatprep.subr.mxu0 0.0
    %153 = vmatpush1.msra.mxu0 0.0
    %154 = vmatprep.subr.mxu0 0.0
    %155 = vmatpush1.msra.mxu0 0.0
    %156 = vmatprep.subr.mxu0 0.0
    %157 = vmatpush1.msra.mxu0 0.0
    %158 = vmatprep.subr.mxu0 0.0
    %159 = vmatpush1.msra.mxu0 0.0
    %160 = vmatprep.subr.mxu0 0.0
    %161 = vmatpush1.msra.mxu0 0.0
    %162 = vmatprep.subr.mxu0 0.0
    %163 = vmatpush1.msra.mxu0 0.0
    %164 = vmatprep.subr.mxu0 0.0
    %165 = vmatpush1.msra.mxu0 0.0
    %166 = vmatprep.subr.mxu0 0.0
    %167 = vmatpush1.msra.mxu0 0.0
    %168 = vmatprep.subr.mxu0 0.0
    %169 = vmatpush1.msra.mxu0 0.0
    %170 = vmatprep.subr.mxu0 0.0
    %171 = vmatpush1.msra.mxu0 0.0
    %172 = vmatprep.subr.mxu0 0.0
    %173 = vmatpush1.msra.mxu0 0.0
    %174 = vmatprep.subr.mxu0 0.0
    %175 = vmatpush1.msra.mxu0 0.0
    %176 = vmatprep.mubr.f32.mxu0 0.0
    %177 = vmatmul.mubr.f32.gmra.mrb[0].mxu0 %v110
    %v178 = vpop.f32.mrb[0].mxu0
    %v179 = vadd.f32 %v107, %v178
    %v180 = vpop.f32.mrb[0].mxu0
    %181 = vdwg.mxu0
    %v182 = vmax.f32 %v179, 0.0
    %v183 = vlaneseq
    %v184 = vshrl.u32 %v183, 7
    %v185 = vsub.s32 0, %v184
    %v186 = vrot.slane %v24, %v185
    %v188 = vsel %vm108, %v182, 0
    %190 = vmatprep.subr.mxu0 0.0
    %191 = vmatpush1.msra.mxu0 %v18
    %192 = vmatprep.subr.mxu0 0.0
    %193 = vmatpush1.msra.mxu0 %v19
    %194 = vmatprep.subr.mxu0 0.0
    %195 = vmatpush1.msra.mxu0 %v20
    %196 = vmatprep.subr.mxu0 0.0
    %197 = vmatpush1.msra.mxu0 %v21
    %198 = vmatprep.subr.mxu0 0.0
    %199 = vmatpush1.msra.mxu0 0.0
    %200 = vmatprep.subr.mxu0 0.0
    %201 = vmatpush1.msra.mxu0 0.0
    %202 = vmatprep.subr.mxu0 0.0
    %203 = vmatpush1.msra.mxu0 0.0
    %204 = vmatprep.subr.mxu0 0.0
    %205 = vmatpush1.msra.mxu0 0.0
    %206 = vmatprep.subr.mxu0 0.0
    %207 = vmatpush1.msra.mxu0 0.0
    %208 = vmatprep.subr.mxu0 0.0
    %209 = vmatpush1.msra.mxu0 0.0
    %210 = vmatprep.subr.mxu0 0.0
    %211 = vmatpush1.msra.mxu0 0.0
    %212 = vmatprep.subr.mxu0 0.0
    %213 = vmatpush1.msra.mxu0 0.0
    %214 = vmatprep.subr.mxu0 0.0
    %215 = vmatpush1.msra.mxu0 0.0
    %216 = vmatprep.subr.mxu0 0.0
    %217 = vmatpush1.msra.mxu0 0.0
    %218 = vmatprep.subr.mxu0 0.0
    %219 = vmatpush1.msra.mxu0 0.0
    %220 = vmatprep.subr.mxu0 0.0
    %221 = vmatpush1.msra.mxu0 0.0
    %222 = vmatprep.subr.mxu0 0.0
    %223 = vmatpush1.msra.mxu0 0.0
    %224 = vmatprep.subr.mxu0 0.0
    %225 = vmatpush1.msra.mxu0 0.0
    %226 = vmatprep.subr.mxu0 0.0
    %227 = vmatpush1.msra.mxu0 0.0
    %228 = vmatprep.subr.mxu0 0.0
    %229 = vmatpush1.msra.mxu0 0.0
    %230 = vmatprep.subr.mxu0 0.0
    %231 = vmatpush1.msra.mxu0 0.0
    %232 = vmatprep.subr.mxu0 0.0
    %233 = vmatpush1.msra.mxu0 0.0
    %234 = vmatprep.subr.mxu0 0.0
    %235 = vmatpush1.msra.mxu0 0.0
    %236 = vmatprep.subr.mxu0 0.0
    %237 = vmatpush1.msra.mxu0 0.0
    %238 = vmatprep.subr.mxu0 0.0
    %239 = vmatpush1.msra.mxu0 0.0
    %240 = vmatprep.subr.mxu0 0.0
    %241 = vmatpush1.msra.mxu0 0.0
    %242 = vmatprep.subr.mxu0 0.0
    %243 = vmatpush1.msra.mxu0 0.0
    %244 = vmatprep.subr.mxu0 0.0
    %245 = vmatpush1.msra.mxu0 0.0
    %246 = vmatprep.subr.mxu0 0.0
    %247 = vmatpush1.msra.mxu0 0.0
    %248 = vmatprep.subr.mxu0 0.0
    %249 = vmatpush1.msra.mxu0 0.0
    %250 = vmatprep.subr.mxu0 0.0
    %251 = vmatpush1.msra.mxu0 0.0
    %252 = vmatprep.subr.mxu0 0.0
    %253 = vmatpush1.msra.mxu0 0.0
    %254 = vmatprep.mubr.f32.mxu0 0.0
    %255 = vmatmul.mubr.f32.gmra.mrb[0].mxu0 %v188
    %v256 = vpop.f32.mrb[0].mxu0
    %v257 = vadd.f32 %v186, %v256
    %v258 = vpop.f32.mrb[0].mxu0
    %259 = vdwg.mxu0
    %vm260 = vcmask 25600
    %261 = vst.msk [vmem:[#allocation2] sm:$0x3] %vm260, %v257
    // Predicated region
    $region10: #{tpu_custom_call.1} parent=1 // pred_check
      _
    $region11: #{tpu_custom_call.1} parent=1 // pred_check_branch
      %263 = sbr.rel (0) target = $region13
    $region12: #{tpu_custom_call.1} parent=1 // pred_region
      %s265 = ssub.s32 32, 32
      %266 = vsyncadd [#allocation3], %s265
      %s268 = sshll.u32 [#allocation2], 4
      %s269 = int_to_ptr.vmem [resolvable:$true] %s268
      %271 = dma.vmem_to_hbm [thread:$0]  %s269, 32, %s2, [#allocation3]
    $region13: #{tpu_custom_call.1} parent=1 // pred_fallthru
      _
    // Predicated region
    $region14: #{tpu_custom_call.1} parent=1 // pred_check
      _
    $region15: #{tpu_custom_call.1} parent=1 // pred_check_branch
      %273 = sbr.rel (0) target = $region17
    $region16: #{tpu_custom_call.1} parent=1 // pred_region
      %274 = dma.done [#allocation3], 32
    $region17: #{tpu_custom_call.1} parent=1 // pred_fallthru
      _
    %275 = vsyncpa [#allocation3], 1

</llo_original>
